<compile_context>
chip_gen: v6e
topology: v6e:2x2x1
jax: 0.10.0
libtpu: 0.0.40
codegen_flags: <defaults>
</compile_context>

<pallas_src>
import functools

import jax
import jax.numpy as jnp
from jax.experimental import pallas as pl
from jax.experimental.pallas import tpu as pltpu


def _encoder_kernel(x_ref, w1_ref, b1_ref, w2_ref, b2_ref, o_ref):
    # x_ref : (TB, input_dim)        original dtype (f32) -- batch-tiled stream
    # w1_ref: (input_dim, hidden_p)  bf16, pre-transposed (K, N) -- VMEM resident
    # b1_ref: (1, hidden_p)          f32
    # w2_ref: (hidden_p, latent_p)   bf16, pre-transposed (K, N) -- VMEM resident
    # b2_ref: (1, latent_p)          f32
    # o_ref : (TB, latent_p)
    x = x_ref[...].astype(w1_ref.dtype)                 # in-kernel bf16 cast (no HBM copy)
    h = jnp.dot(x, w1_ref[...], preferred_element_type=jnp.float32)
    h = jnp.maximum(h + b1_ref[...], 0.0)               # bias + ReLU in f32
    y = jnp.dot(h.astype(w2_ref.dtype), w2_ref[...],
                preferred_element_type=jnp.float32)
    o_ref[...] = (y + b2_ref[...]).astype(o_ref.dtype)


def _round_up(n, m):
    return ((n + m - 1) // m) * m


def time_series_encoder(x, w1, b1, w2, b2, *,
                        block_batch=512,
                        compute_dtype=jnp.bfloat16,
                        out_dtype=None):
    """x: (batch, seq, features). Torch nn.Linear layouts:
    w1: (hidden, input_dim), b1: (hidden,), w2: (latent, hidden), b2: (latent,)."""
    batch, seq, feat = x.shape
    input_dim = seq * feat
    hidden_dim = w1.shape[0]
    latent_dim = w2.shape[0]
    assert w1.shape == (hidden_dim, input_dim)
    assert w2.shape == (latent_dim, hidden_dim)
    out_dtype = x.dtype if out_dtype is None else out_dtype

    # Lane-dense padding for the matmul N dims / output store.
    hidden_p = _round_up(hidden_dim, 128)
    latent_p = _round_up(latent_dim, 128)

    # Batch tile: multiple of 16 (bf16 packs 16 sublanes per vreg).  Split the
    # batch into >=2 near-equal tiles (when big enough) so the x DMA overlaps
    # compute and padding waste stays small (e.g. batch=257 -> tb=144, not 512).
    sub = 16
    if batch <= 2 * sub:
        tb = _round_up(batch, sub)
    else:
        num_tiles = max(pl.cdiv(batch, block_batch), 2)
        tb = min(_round_up(pl.cdiv(batch, num_tiles), sub), _round_up(block_batch, sub))
    batch_p = _round_up(batch, tb)

    # --- parameter / activation prep (in production the padded, transposed
    # bf16 params would be prepared once at model init, not per call) --------
    # x stays in its original dtype; only the (cheap) batch pad happens here.
    x_flat = x.reshape(batch, input_dim)
    x_p = jnp.pad(x_flat, ((0, batch_p - batch), (0, 0)))

    # Pre-transpose weights to MXU-native (K, N) layout; pad N (and K of W2).
    w1_p = jnp.pad(w1.astype(compute_dtype).T,
                   ((0, 0), (0, hidden_p - hidden_dim)))          # (input_dim, hidden_p)
    b1_p = jnp.pad(b1.astype(jnp.float32),
                   (0, hidden_p - hidden_dim)).reshape(1, hidden_p)
    w2_p = jnp.pad(w2.astype(compute_dtype).T,
                   ((0, hidden_p - hidden_dim), (0, latent_p - latent_dim)))  # (hidden_p, latent_p)
    b2_p = jnp.pad(b2.astype(jnp.float32),
                   (0, latent_p - latent_dim)).reshape(1, latent_p)

    grid = (batch_p // tb,)

    # Right-size the VMEM request: resident weights/biases + double-buffered
    # x / out tiles, with ~30% headroom, capped well below v7x's 64 MiB.
    x_isz = jnp.dtype(x.dtype).itemsize
    o_isz = jnp.dtype(out_dtype).itemsize
    w_isz = jnp.dtype(compute_dtype).itemsize
    footprint = (input_dim * hidden_p * w_isz
                 + hidden_p * latent_p * w_isz
                 + (hidden_p + latent_p) * 4
                 + 2 * tb * input_dim * x_isz
                 + 2 * tb * latent_p * o_isz)
    vmem_limit = min(48 << 20, max(int(footprint * 1.3), 4 << 20))

    out = pl.pallas_call(
        _encoder_kernel,
        out_shape=jax.ShapeDtypeStruct((batch_p, latent_p), out_dtype),
        grid_spec=pltpu.PrefetchScalarGridSpec(
            num_scalar_prefetch=0,
            grid=grid,
            in_specs=[
                # batch-tiled activation stream (original dtype, cast in-kernel)
                pl.BlockSpec((tb, input_dim), lambda i: (i, 0)),
                # weights / biases: same block every step -> VMEM resident
                pl.BlockSpec((input_dim, hidden_p), lambda i: (0, 0)),
                pl.BlockSpec((1, hidden_p), lambda i: (0, 0)),
                pl.BlockSpec((hidden_p, latent_p), lambda i: (0, 0)),
                pl.BlockSpec((1, latent_p), lambda i: (0, 0)),
            ],
            out_specs=pl.BlockSpec((tb, latent_p), lambda i: (i, 0)),
        ),
        compiler_params=pltpu.CompilerParams(
            # batch tiles are independent -> megacore-shardable on v7x
            dimension_semantics=("parallel",),
            vmem_limit_bytes=vmem_limit,
        ),
    )(x_p, w1_p, b1_p, w2_p, b2_p)

    # Strip batch / latent padding outside the kernel (keeps the exact
    # PyTorch output interface: (batch, latent_dim)).
    return out[:batch, :latent_dim]


if __name__ == "__main__":
    # Small shapes consistent with the forward: input_dim = seq * features.
    batch, seq, feat = 2, 8, 16
    input_dim = seq * feat          # 128
    hidden_dim = 32
    latent_dim = 16

    key = jax.random.PRNGKey(0)
    kx, k1, k2, k3, k4 = jax.random.split(key, 5)

    x = jax.random.normal(kx, (batch, seq, feat), dtype=jnp.float32)
    # Deterministic synthetic parameters (torch nn.Linear weight layout: (out, in)).
    w1 = jax.random.normal(k1, (hidden_dim, input_dim), dtype=jnp.float32) * 0.05
    b1 = jax.random.normal(k2, (hidden_dim,), dtype=jnp.float32) * 0.05
    w2 = jax.random.normal(k3, (latent_dim, hidden_dim), dtype=jnp.float32) * 0.05
    b2 = jax.random.normal(k4, (latent_dim,), dtype=jnp.float32) * 0.05

    encoder = jax.jit(functools.partial(time_series_encoder, block_batch=512))
    y = encoder(x, w1, b1, w2, b2)
    y = jax.block_until_ready(y)

    # Pure-JAX f32 reference (kernel runs the MXU in bf16 -> relaxed tolerance).
    x_flat = x.reshape(batch, input_dim)
    h_ref = jnp.maximum(x_flat @ w1.T + b1, 0.0)
    y_ref = h_ref @ w2.T + b2
    assert y.shape == (batch, latent_dim)
    assert jnp.allclose(y, y_ref, atol=2e-2, rtol=2e-2), (
        float(jnp.max(jnp.abs(y - y_ref))))

    print("KERNEL_OK")
</pallas_src>

<mosaic_0001>
module attributes {stable_mosaic.version = 11 : i64} {
  func.func @_encoder_kernel(%arg0: i32, %arg1: memref<16x128xf32, #tpu.memory_space<vmem>>, %arg2: memref<128x128xbf16, #tpu.memory_space<vmem>>, %arg3: memref<1x128xf32, #tpu.memory_space<vmem>>, %arg4: memref<128x128xbf16, #tpu.memory_space<vmem>>, %arg5: memref<1x128xf32, #tpu.memory_space<vmem>>, %arg6: memref<16x128xf32, #tpu.memory_space<vmem>>) attributes {dimension_semantics = [#tpu.dimension_semantics<parallel>], iteration_bounds = array<i64: 1>, scalar_prefetch = 0 : i64, scratch_operands = 0 : i64, tpu.core_type = #tpu.core_type<tc>, window_params = [{transform_indices = @transform_0, window_bounds = array<i64: 16, 128>}, {pipeline_mode = #tpu.pipeline_mode<synchronous>, transform_indices = @transform_1, window_bounds = array<i64: 128, 128>}, {pipeline_mode = #tpu.pipeline_mode<synchronous>, transform_indices = @transform_2, window_bounds = array<i64: 1, 128>}, {pipeline_mode = #tpu.pipeline_mode<synchronous>, transform_indices = @transform_3, window_bounds = array<i64: 128, 128>}, {pipeline_mode = #tpu.pipeline_mode<synchronous>, transform_indices = @transform_4, window_bounds = array<i64: 1, 128>}, {transform_indices = @transform_5, window_bounds = array<i64: 16, 128>}]} {
    %c0 = arith.constant 0 : index
    %c0_0 = arith.constant 0 : index
    %0 = vector.load %arg1[%c0, %c0_0] : memref<16x128xf32, #tpu.memory_space<vmem>>, vector<16x128xf32>
    %1 = arith.truncf %0 : vector<16x128xf32> to vector<16x128xbf16>
    %c0_1 = arith.constant 0 : index
    %c0_2 = arith.constant 0 : index
    %2 = vector.load %arg2[%c0_1, %c0_2] : memref<128x128xbf16, #tpu.memory_space<vmem>>, vector<128x128xbf16>
    %cst = arith.constant dense<0.000000e+00> : vector<16x128xf32>
    %3 = tpu.matmul %1, %2, %cst {dimension_numbers = #tpu.dot_dimension_numbers<[1], [0], [0], [1], [0, 0, 1, 1], [], []>} : vector<16x128xbf16>, vector<128x128xbf16>, vector<16x128xf32> -> vector<16x128xf32>
    %c0_3 = arith.constant 0 : index
    %c0_4 = arith.constant 0 : index
    %4 = vector.load %arg3[%c0_3, %c0_4] : memref<1x128xf32, #tpu.memory_space<vmem>>, vector<1x128xf32>
    %5 = vector.broadcast %4 : vector<1x128xf32> to vector<16x128xf32>
    %6 = arith.addf %3, %5 : vector<16x128xf32>
    %cst_5 = arith.constant 0.000000e+00 : f32
    %7 = vector.broadcast %cst_5 : f32 to vector<16x128xf32>
    %8 = arith.maximumf %6, %7 : vector<16x128xf32>
    %9 = arith.truncf %8 : vector<16x128xf32> to vector<16x128xbf16>
    %c0_6 = arith.constant 0 : index
    %c0_7 = arith.constant 0 : index
    %10 = vector.load %arg4[%c0_6, %c0_7] : memref<128x128xbf16, #tpu.memory_space<vmem>>, vector<128x128xbf16>
    %cst_8 = arith.constant dense<0.000000e+00> : vector<16x128xf32>
    %11 = tpu.matmul %9, %10, %cst_8 {dimension_numbers = #tpu.dot_dimension_numbers<[1], [0], [0], [1], [0, 0, 1, 1], [], []>} : vector<16x128xbf16>, vector<128x128xbf16>, vector<16x128xf32> -> vector<16x128xf32>
    %c0_9 = arith.constant 0 : index
    %c0_10 = arith.constant 0 : index
    %12 = vector.load %arg5[%c0_9, %c0_10] : memref<1x128xf32, #tpu.memory_space<vmem>>, vector<1x128xf32>
    %13 = vector.broadcast %12 : vector<1x128xf32> to vector<16x128xf32>
    %14 = arith.addf %11, %13 : vector<16x128xf32>
    %c0_11 = arith.constant 0 : index
    %c0_12 = arith.constant 0 : index
    %15 = vector.load %arg6[%c0_11, %c0_12] : memref<16x128xf32, #tpu.memory_space<vmem>>, vector<16x128xf32>
    tpu.vector_store %arg6[%c0_11, %c0_12], %14 {strides = array<i32>} : memref<16x128xf32, #tpu.memory_space<vmem>>, vector<16x128xf32>,
    return
  }
  func.func @transform_0(%arg0: i32) -> (i32, i32) {
    %c0_i32 = arith.constant 0 : i32
    %c0_i32_0 = arith.constant 0 : i32
    return %arg0, %c0_i32 : i32, i32
  }
  func.func @transform_1(%arg0: i32) -> (i32, i32) {
    %c0_i32 = arith.constant 0 : i32
    %c0_i32_0 = arith.constant 0 : i32
    %c0_i32_1 = arith.constant 0 : i32
    return %c0_i32, %c0_i32_0 : i32, i32
  }
  func.func @transform_2(%arg0: i32) -> (i32, i32) {
    %c0_i32 = arith.constant 0 : i32
    %c0_i32_0 = arith.constant 0 : i32
    %c0_i32_1 = arith.constant 0 : i32
    return %c0_i32, %c0_i32_0 : i32, i32
  }
  func.func @transform_3(%arg0: i32) -> (i32, i32) {
    %c0_i32 = arith.constant 0 : i32
    %c0_i32_0 = arith.constant 0 : i32
    %c0_i32_1 = arith.constant 0 : i32
    return %c0_i32, %c0_i32_0 : i32, i32
  }
  func.func @transform_4(%arg0: i32) -> (i32, i32) {
    %c0_i32 = arith.constant 0 : i32
    %c0_i32_0 = arith.constant 0 : i32
    %c0_i32_1 = arith.constant 0 : i32
    return %c0_i32, %c0_i32_0 : i32, i32
  }
  func.func @transform_5(%arg0: i32) -> (i32, i32) {
    %c0_i32 = arith.constant 0 : i32
    %c0_i32_0 = arith.constant 0 : i32
    return %arg0, %c0_i32 : i32, i32
  }
}

</mosaic_0001>

<llo_original>
// kernel: time_series_encoder.1
$region0: #{time_series_encoder.1}
  #allocation0 [shape = 'u32[]', space=smem, size = 0x4, offset = 0x4, fixed_abs, tag = 'smem constant byte address 0x4 - core index']
  #allocation1 [shape = 'u32[144,128]{1,0:T(1,128)}', space=vmem, size = 0x12000, scoped, tag = 'internal scratch']
  %s0 = inlined_call_operand.vmem [shape: f32[16,128], index: 0, kind: input, shape index: {}]
  %s1 = inlined_call_operand.vmem [shape: bf16[128,128], index: 1, kind: input, shape index: {}]
  %s2 = inlined_call_operand.vmem [shape: f32[1,128], index: 2, kind: input, shape index: {}]
  %s3 = inlined_call_operand.vmem [shape: bf16[128,128], index: 3, kind: input, shape index: {}]
  %s4 = inlined_call_operand.vmem [shape: f32[1,128], index: 4, kind: input, shape index: {}]
  %s5 = inlined_call_operand.vmem [shape: f32[16,128], index: 5, kind: output, shape index: {}]
  %s6 = sld [smem:[#allocation0]]
  $region30: #{time_series_encoder.1} parent=0
    _
  %s8 = ssub.s32 1, %s6
  %s9 = scalar_select 0, %s8, %s6
  // Predicated region
  $region2: #{time_series_encoder.1} parent=0 // pred_check
    _
  $region3: #{time_series_encoder.1} parent=0 // pred_check_branch
    %11 = sbr.rel (0) target = $region5
  $region4: #{time_series_encoder.1} parent=0 // pred_region
    _
  $region5: #{time_series_encoder.1} parent=0 // pred_fallthru
    _
  // Predicated region
  $region6: #{time_series_encoder.1} parent=0 // pred_check
    _
  $region7: #{time_series_encoder.1} parent=0 // pred_check_branch
    %13 = sbr.rel (0) target = $region9
  $region8: #{time_series_encoder.1} parent=0 // pred_region
    _
  $region9: #{time_series_encoder.1} parent=0 // pred_fallthru
    _
  // Predicated region
  $region10: #{time_series_encoder.1} parent=0 // pred_check
    _
  $region11: #{time_series_encoder.1} parent=0 // pred_check_branch
    %15 = sbr.rel (0) target = $region13
  $region12: #{time_series_encoder.1} parent=0 // pred_region
    _
  $region13: #{time_series_encoder.1} parent=0 // pred_fallthru
    _
  // Predicated region
  $region14: #{time_series_encoder.1} parent=0 // pred_check
    _
  $region15: #{time_series_encoder.1} parent=0 // pred_check_branch
    %17 = sbr.rel (0) target = $region17
  $region16: #{time_series_encoder.1} parent=0 // pred_region
    _
  $region17: #{time_series_encoder.1} parent=0 // pred_fallthru
    _
  // Predicated region
  $region18: #{time_series_encoder.1} parent=0 // pred_check
    _
  $region19: #{time_series_encoder.1} parent=0 // pred_check_branch
    %19 = sbr.rel (0) target = $region21
  $region20: #{time_series_encoder.1} parent=0 // pred_region
    _
  $region21: #{time_series_encoder.1} parent=0 // pred_fallthru
    _
  %v21 = vld [vmem:[%s0] sm:$0xff]
  %v22 = vld [vmem:[%s0 + $0x8] sm:$0xff]
  %v23 = vpack.c.bf16 %v22, %v21
  %v24 = vld [vmem:[%s1] sm:$0xf]
  %v25 = vld [vmem:[%s1 + $0x4] sm:$0xf]
  %v26 = vld [vmem:[%s1 + $0x8] sm:$0xf]
  %v27 = vld [vmem:[%s1 + $0xc] sm:$0xf]
  %v28 = vld [vmem:[%s1 + $0x10] sm:$0xf]
  %v29 = vld [vmem:[%s1 + $0x14] sm:$0xf]
  %v30 = vld [vmem:[%s1 + $0x18] sm:$0xf]
  %v31 = vld [vmem:[%s1 + $0x1c] sm:$0xf]
  %v32 = vld [vmem:[%s1 + $0x20] sm:$0xf]
  %v33 = vld [vmem:[%s1 + $0x24] sm:$0xf]
  %v34 = vld [vmem:[%s1 + $0x28] sm:$0xf]
  %v35 = vld [vmem:[%s1 + $0x2c] sm:$0xf]
  %v36 = vld [vmem:[%s1 + $0x30] sm:$0xf]
  %v37 = vld [vmem:[%s1 + $0x34] sm:$0xf]
  %v38 = vld [vmem:[%s1 + $0x38] sm:$0xf]
  %v39 = vld [vmem:[%s1 + $0x3c] sm:$0xf]
  %v40 = vld [vmem:[%s2] sm:$0x1]
  %v42 = vlaneseq
  %v43 = vshrl.u32 %v42, 7
  %v44 = vsub.s32 0, %v43
  %v45 = vrot.slane %v40, %v44
  %v63 = vunpack.c.l.b16 %v24
  %v64 = vunpack.c.l.b16 %v25
  %v65 = vunpack.c.l.b16 %v26
  %v66 = vunpack.c.l.b16 %v27
  %v67 = vunpack.c.l.b16 %v28
  %v68 = vunpack.c.l.b16 %v29
  %v69 = vunpack.c.l.b16 %v30
  %v70 = vunpack.c.l.b16 %v31
  %v71 = vunpack.c.l.b16 %v32
  %v72 = vunpack.c.l.b16 %v33
  %v73 = vunpack.c.l.b16 %v34
  %v74 = vunpack.c.l.b16 %v35
  %v75 = vunpack.c.l.b16 %v36
  %v76 = vunpack.c.l.b16 %v37
  %v77 = vunpack.c.l.b16 %v38
  %v78 = vunpack.c.l.b16 %v39
  %v79 = vpack.c.b16 %v64, %v63
  %v80 = vpack.c.b16 %v66, %v65
  %v81 = vpack.c.b16 %v68, %v67
  %v82 = vpack.c.b16 %v70, %v69
  %v83 = vpack.c.b16 %v72, %v71
  %v84 = vpack.c.b16 %v74, %v73
  %v85 = vpack.c.b16 %v76, %v75
  %v86 = vpack.c.b16 %v78, %v77
  %95 = vmatprep.subr.bf16.mxu0 0
  %96 = vmatpush1.bf16.msra.mxu0 %v86
  %97 = vmatprep.subr.bf16.mxu0 0
  %98 = vmatpush1.bf16.msra.mxu0 %v85
  %99 = vmatprep.subr.bf16.mxu0 0
  %100 = vmatpush1.bf16.msra.mxu0 %v84
  %101 = vmatprep.subr.bf16.mxu0 0
  %102 = vmatpush1.bf16.msra.mxu0 %v83
  %103 = vmatprep.subr.bf16.mxu0 0
  %104 = vmatpush1.bf16.msra.mxu0 %v82
  %105 = vmatprep.subr.bf16.mxu0 0
  %106 = vmatpush1.bf16.msra.mxu0 %v81
  %107 = vmatprep.subr.bf16.mxu0 0
  %108 = vmatpush1.bf16.msra.mxu0 %v80
  %109 = vmatprep.subr.bf16.mxu0 0
  %110 = vmatpush1.bf16.msra.mxu0 %v79
  %111 = vmatprep.subr.bf16.mxu0 0
  %112 = vmatpush2.bf16.msra.mxu0 0
  %113 = vmatprep.subr.bf16.mxu0 0
  %114 = vmatpush2.bf16.msra.mxu0 0
  %115 = vmatprep.subr.bf16.mxu0 0
  %116 = vmatpush2.bf16.msra.mxu0 0
  %117 = vmatprep.subr.bf16.mxu0 0
  %118 = vmatpush2.bf16.msra.mxu0 0
  %119 = vmatprep.subr.bf16.mxu0 0
  %120 = vmatpush2.bf16.msra.mxu0 0
  %121 = vmatprep.subr.bf16.mxu0 0
  %122 = vmatpush2.bf16.msra.mxu0 0
  %123 = vmatprep.subr.bf16.mxu0 0
  %124 = vmatpush2.bf16.msra.mxu0 0
  %125 = vmatprep.subr.bf16.mxu0 0
  %126 = vmatpush2.bf16.msra.mxu0 0
  %127 = vmatprep.mubr.bf16.mxu0 0
  %128 = vmatmul.mubr.bf16.gmra.mxu0 %v23
  %v129 = vpop.f32.mrf.mxu0
  %v130 = vadd.f32 %v45, %v129
  %v131 = vpop.f32.mrf.mxu0
  %v132 = vpop.f32.mrf.mxu0
  %v133 = vadd.f32 %v45, %v132
  %v134 = vpop.f32.mrf.mxu0
  %135 = vdwg.mxu0
  %v136 = vmax.f32 %v130, 0.0
  %v137 = vmax.f32 %v133, 0.0
  %v138 = vpack.c.bf16 %v137, %v136
  %v139 = vld [vmem:[%s3] sm:$0xf]
  %v140 = vld [vmem:[%s3 + $0x4] sm:$0xf]
  %v141 = vld [vmem:[%s3 + $0x8] sm:$0xf]
  %v142 = vld [vmem:[%s3 + $0xc] sm:$0xf]
  %v143 = vld [vmem:[%s3 + $0x10] sm:$0xf]
  %v144 = vld [vmem:[%s3 + $0x14] sm:$0xf]
  %v145 = vld [vmem:[%s3 + $0x18] sm:$0xf]
  %v146 = vld [vmem:[%s3 + $0x1c] sm:$0xf]
  %v147 = vld [vmem:[%s3 + $0x20] sm:$0xf]
  %v148 = vld [vmem:[%s3 + $0x24] sm:$0xf]
  %v149 = vld [vmem:[%s3 + $0x28] sm:$0xf]
  %v150 = vld [vmem:[%s3 + $0x2c] sm:$0xf]
  %v151 = vld [vmem:[%s3 + $0x30] sm:$0xf]
  %v152 = vld [vmem:[%s3 + $0x34] sm:$0xf]
  %v153 = vld [vmem:[%s3 + $0x38] sm:$0xf]
  %v154 = vld [vmem:[%s3 + $0x3c] sm:$0xf]
  %v155 = vld [vmem:[%s4] sm:$0x1]
  %v157 = vlaneseq
  %v158 = vshrl.u32 %v157, 7
  %v159 = vsub.s32 0, %v158
  %v160 = vrot.slane %v155, %v159
  %v178 = vunpack.c.l.b16 %v139
  %v179 = vunpack.c.l.b16 %v140
  %v180 = vunpack.c.l.b16 %v141
  %v181 = vunpack.c.l.b16 %v142
  %v182 = vunpack.c.l.b16 %v143
  %v183 = vunpack.c.l.b16 %v144
  %v184 = vunpack.c.l.b16 %v145
  %v185 = vunpack.c.l.b16 %v146
  %v186 = vunpack.c.l.b16 %v147
  %v187 = vunpack.c.l.b16 %v148
  %v188 = vunpack.c.l.b16 %v149
  %v189 = vunpack.c.l.b16 %v150
  %v190 = vunpack.c.l.b16 %v151
  %v191 = vunpack.c.l.b16 %v152
  %v192 = vunpack.c.l.b16 %v153
  %v193 = vunpack.c.l.b16 %v154
  %v194 = vpack.c.b16 %v179, %v178
  %v195 = vpack.c.b16 %v181, %v180
  %v196 = vpack.c.b16 %v183, %v182
  %v197 = vpack.c.b16 %v185, %v184
  %v198 = vpack.c.b16 %v187, %v186
  %v199 = vpack.c.b16 %v189, %v188
  %v200 = vpack.c.b16 %v191, %v190
  %v201 = vpack.c.b16 %v193, %v192
  %210 = vmatprep.subr.bf16.mxu0 0
  %211 = vmatpush1.bf16.msra.mxu0 %v201
  %212 = vmatprep.subr.bf16.mxu0 0
  %213 = vmatpush1.bf16.msra.mxu0 %v200
  %214 = vmatprep.subr.bf16.mxu0 0
  %215 = vmatpush1.bf16.msra.mxu0 %v199
  %216 = vmatprep.subr.bf16.mxu0 0
  %217 = vmatpush1.bf16.msra.mxu0 %v198
  %218 = vmatprep.subr.bf16.mxu0 0
  %219 = vmatpush1.bf16.msra.mxu0 %v197
  %220 = vmatprep.subr.bf16.mxu0 0
  %221 = vmatpush1.bf16.msra.mxu0 %v196
  %222 = vmatprep.subr.bf16.mxu0 0
  %223 = vmatpush1.bf16.msra.mxu0 %v195
  %224 = vmatprep.subr.bf16.mxu0 0
  %225 = vmatpush1.bf16.msra.mxu0 %v194
  %226 = vmatprep.subr.bf16.mxu0 0
  %227 = vmatpush2.bf16.msra.mxu0 0
  %228 = vmatprep.subr.bf16.mxu0 0
  %229 = vmatpush2.bf16.msra.mxu0 0
  %230 = vmatprep.subr.bf16.mxu0 0
  %231 = vmatpush2.bf16.msra.mxu0 0
  %232 = vmatprep.subr.bf16.mxu0 0
  %233 = vmatpush2.bf16.msra.mxu0 0
  %234 = vmatprep.subr.bf16.mxu0 0
  %235 = vmatpush2.bf16.msra.mxu0 0
  %236 = vmatprep.subr.bf16.mxu0 0
  %237 = vmatpush2.bf16.msra.mxu0 0
  %238 = vmatprep.subr.bf16.mxu0 0
  %239 = vmatpush2.bf16.msra.mxu0 0
  %240 = vmatprep.subr.bf16.mxu0 0
  %241 = vmatpush2.bf16.msra.mxu0 0
  %242 = vmatprep.mubr.bf16.mxu0 0
  %243 = vmatmul.mubr.bf16.gmra.mxu0 %v138
  %v244 = vpop.f32.mrf.mxu0
  %v245 = vadd.f32 %v160, %v244
  %v246 = vpop.f32.mrf.mxu0
  %v247 = vpop.f32.mrf.mxu0
  %v248 = vadd.f32 %v160, %v247
  %v249 = vpop.f32.mrf.mxu0
  %250 = vdwg.mxu0
  %251 = vst [vmem:[%s5] sm:$0xff] %v245
  %252 = vst [vmem:[%s5 + $0x8] sm:$0xff] %v248
  // Predicated region
  $region22: #{time_series_encoder.1} parent=0 // pred_check
    _
  $region23: #{time_series_encoder.1} parent=0 // pred_check_branch
    %254 = sbr.rel (0) target = $region25
  $region24: #{time_series_encoder.1} parent=0 // pred_region
    _
  $region25: #{time_series_encoder.1} parent=0 // pred_fallthru
    _
  // Predicated region
  $region26: #{time_series_encoder.1} parent=0 // pred_check
    _
  $region27: #{time_series_encoder.1} parent=0 // pred_check_branch
    %256 = sbr.rel (0) target = $region29
  $region28: #{time_series_encoder.1} parent=0 // pred_region
    _
  $region29: #{time_series_encoder.1} parent=0 // pred_fallthru
    _

</llo_original>
